<compile_context>
chip_gen: v5e
topology: v5e:2x2
jax: 0.10.0
libtpu: 0.0.40
codegen_flags: <defaults>
</compile_context>

<pallas_src>
import functools
import math
from typing import Any, NamedTuple, Tuple

import jax
import jax.numpy as jnp
from jax.experimental import pallas as pl
from jax.experimental.pallas import tpu as pltpu

SHIFT = math.log(2.0)  # ShiftedSoftplus shift
_MIB = 1024 * 1024

# Some JAX builds may reject pipeline_mode=pl.Buffered(1) on pallas_call
# BlockSpecs; probed once at runtime, falls back to default double-buffering.
_SINGLE_BUFFER_OK = True


def _round_up(x, m):
    return ((x + m - 1) // m) * m


def _vmem_capacity_bytes():
    try:
        cap = getattr(pltpu.get_tpu_info(), "vmem_capacity_bytes", None)
        if cap:
            return int(cap)
    except Exception:
        pass
    return 64 * _MIB  # conservative (v7x per-TC) if the query is unavailable


def _choose_tm(M, dims_pad, resident_weight_bytes, x_itemsize, out_itemsize, vmem_cap):
    """Generation-aware batch tile: as large as VMEM allows after weights,
    capped at 256 on 64-MiB-VMEM parts (v7x) and 512 elsewhere."""
    if M <= 256:
        return _round_up(max(M, 16), 16)  # 16 keeps bf16 x/out tiles legal
    cap = 256 if vmem_cap <= 64 * _MIB else 512
    budget = int(0.7 * vmem_cap) - resident_weight_bytes
    max_dim = max(dims_pad)
    per_row = (2 * dims_pad[0] * x_itemsize        # double-buffered x tile
               + 2 * dims_pad[-1] * out_itemsize   # double-buffered out tile
               + 3 * max_dim * 4)                  # live f32 h slabs
    tm = cap
    while tm > 128 and tm * per_row > max(budget, 0):
        tm //= 2
    return tm


def _apply_activation(y, activation):
    """Elementwise activation, kept in f32 (VPU/EUP filler under the MXU stream)."""
    if activation == "relu":
        return jnp.maximum(y, 0.0)
    if activation == "silu":
        # sigmoid = 1/(1+exp(-y)); exp + approx reciprocal both land on the EUP slot.
        return y * pl.reciprocal(1.0 + jnp.exp(-y), approx=True)
    if activation == "softplus":
        # numerically stable softplus, shifted by log(2) (ShiftedSoftplus)
        return jnp.maximum(y, 0.0) + jnp.log1p(jnp.exp(-jnp.abs(y))) - SHIFT
    if activation is None:
        return y
    raise ValueError(f"unknown activation: {activation}")


def _mlp_fused_kernel(*refs, activation, num_layers):
    """Fused MLP. refs = (x, w0, b0, ..., w{L-1}, b{L-1}, out).

    Matmuls run in the operands' native (ideally bf16) dtype with an f32 MXU
    accumulator; bias-add + activation stay f32; the running activation h is
    cast only at the next dot input and at the final store.
    """
    x_ref, o_ref = refs[0], refs[-1]
    h = x_ref[...]
    for l in range(num_layers):
        w_ref = refs[1 + 2 * l]
        b_ref = refs[2 + 2 * l]
        lhs = h if h.dtype == w_ref.dtype else h.astype(w_ref.dtype)
        y = jnp.dot(lhs, w_ref[...], preferred_element_type=jnp.float32)
        y = y + b_ref[...]  # bias is pre-cast to f32 outside the kernel
        h = _apply_activation(y, activation)
    o_ref[...] = h.astype(o_ref.dtype)


class PreparedMLP(NamedTuple):
    layers: Tuple[Tuple[jax.Array, jax.Array], ...]  # padded (W (K,N) compute_dtype, b (1,N) f32)
    dims: Tuple[int, ...]       # logical feature dims [K0, N0, ..., N_last]
    dims_pad: Tuple[int, ...]   # lane-dense (128-multiple) feature dims
    compute_dtype: Any


def prepare_mlp_params(params, input_dim, *, compute_dtype=jnp.bfloat16):
    """One-time (out of the per-call path) padding + casting of weights/biases."""
    dims = (input_dim,) + tuple(w.shape[1] for w, _ in params)
    dims_pad = tuple(_round_up(d, 128) for d in dims)
    layers = []
    for l, (w, b) in enumerate(params):
        k, n = w.shape
        if (dims_pad[l] - k) or (dims_pad[l + 1] - n):
            w = jnp.pad(w, ((0, dims_pad[l] - k), (0, dims_pad[l + 1] - n)))
        b2 = jnp.reshape(b, (1, -1))
        if dims_pad[l + 1] - n:
            b2 = jnp.pad(b2, ((0, 0), (0, dims_pad[l + 1] - n)))
        layers.append((w.astype(compute_dtype), b2.astype(jnp.float32)))
    return PreparedMLP(tuple(layers), dims, dims_pad, compute_dtype)


def _const_spec(shape, single_buffer):
    index_map = lambda i: (0,) * len(shape)
    if single_buffer:
        # Block index never changes across grid steps -> a second pipeline
        # buffer is pure VMEM waste; single-buffer it.
        return pl.BlockSpec(shape, index_map, pipeline_mode=pl.Buffered(1))
    return pl.BlockSpec(shape, index_map)


def _build_and_run(x_pad, prepared, activation, tm, n_tiles, vmem_cap,
                   single_buffer, parallel):
    dims_pad = prepared.dims_pad
    num_layers = len(prepared.layers)
    M_pad = x_pad.shape[0]
    out_dtype = x_pad.dtype

    inputs = [x_pad]
    in_specs = [pl.BlockSpec((tm, dims_pad[0]), lambda i: (i, 0))]
    for (w, b) in prepared.layers:
        inputs += [w, b]
        in_specs += [_const_spec(w.shape, single_buffer),
                     _const_spec(b.shape, single_buffer)]
    out_spec = pl.BlockSpec((tm, dims_pad[-1]), lambda i: (i, 0))

    # Explicit scoped-VMEM limit from the real footprint (+50% headroom),
    # clamped to ~90% of physical capacity.
    wbuf = 1 if single_buffer else 2
    weight_bytes = sum(w.size * w.dtype.itemsize for w, _ in prepared.layers) * wbuf
    bias_bytes = sum(8 * b.shape[-1] * 4 for _, b in prepared.layers) * wbuf  # 1 row pads to 8 sublanes
    x_bytes = 2 * tm * dims_pad[0] * x_pad.dtype.itemsize
    o_bytes = 2 * tm * dims_pad[-1] * out_dtype.itemsize
    h_bytes = 3 * tm * max(dims_pad) * 4
    footprint = weight_bytes + bias_bytes + x_bytes + o_bytes + h_bytes
    vmem_limit = int(min(max(1.5 * footprint, 32 * _MIB), 0.9 * vmem_cap))

    flops = sum(2 * M_pad * dims_pad[l] * dims_pad[l + 1] for l in range(num_layers))
    transcendentals = 0
    if activation in ("silu", "softplus"):
        transcendentals = sum(2 * M_pad * dims_pad[l + 1] for l in range(num_layers))
    bytes_accessed = int(
        x_pad.size * x_pad.dtype.itemsize
        + sum(a.size * a.dtype.itemsize for a in inputs[1:])
        + M_pad * dims_pad[-1] * out_dtype.itemsize)

    kernel = functools.partial(
        _mlp_fused_kernel, activation=activation, num_layers=num_layers)

    return pl.pallas_call(
        kernel,
        out_shape=jax.ShapeDtypeStruct((M_pad, dims_pad[-1]), out_dtype),
        grid_spec=pltpu.PrefetchScalarGridSpec(
            num_scalar_prefetch=0,
            grid=(n_tiles,),
            in_specs=in_specs,
            out_specs=out_spec,
        ),
        compiler_params=pltpu.CompilerParams(
            dimension_semantics=(("parallel",) if parallel else ("arbitrary",)),
            vmem_limit_bytes=vmem_limit,
        ),
        cost_estimate=pl.CostEstimate(
            flops=flops,
            transcendentals=transcendentals,
            bytes_accessed=bytes_accessed,
        ),
    )(*inputs)


def mlp_forward(x, params, activation, *, tm=None, compute_dtype=jnp.bfloat16):
    """act(...act(x @ W0 + b0)... @ W_{L-1} + b_{L-1}) in a single fused Pallas call.

    `params` may be a raw [(W (K,N), b (1,N)), ...] list (padded/cast on the fly)
    or a PreparedMLP from prepare_mlp_params (preferred: padding/casting hoisted
    out of the per-call path).
    """
    global _SINGLE_BUFFER_OK
    if not isinstance(params, PreparedMLP):
        params = prepare_mlp_params(params, x.shape[1], compute_dtype=compute_dtype)
    M, K0 = x.shape
    assert K0 == params.dims[0]
    dims_pad = params.dims_pad
    vmem_cap = _vmem_capacity_bytes()

    resident_weight_bytes = (
        sum(w.size * w.dtype.itemsize for w, _ in params.layers)
        + sum(8 * b.shape[-1] * 4 for _, b in params.layers))
    if tm is None:
        tm = _choose_tm(M, dims_pad, resident_weight_bytes,
                        x.dtype.itemsize, x.dtype.itemsize, vmem_cap)
    n_tiles = pl.cdiv(M, tm)
    M_pad = n_tiles * tm
    # TODO(synk): if resident_weight_bytes exceeds the VMEM budget (very wide or
    # deep MLPs), stream weights per layer via memory_space=pl.ANY + manual
    # double-buffered make_async_copy (or tile N/K with an f32 accumulator)
    # instead of whole-weight residency.

    pad_rows, pad_cols = M_pad - M, dims_pad[0] - K0
    x_pad = x if (pad_rows == 0 and pad_cols == 0) else jnp.pad(
        x, ((0, pad_rows), (0, pad_cols)))

    # Megacore: shard the batch grid only when batch traffic dominates; in the
    # weight-bound (small batch) regime "arbitrary" avoids DMA-ing every W/b
    # into both cores' VMEM (v7x).
    x_bytes = M_pad * dims_pad[0] * x.dtype.itemsize
    parallel = n_tiles > 1 and x_bytes >= resident_weight_bytes

    attempts = (True, False) if _SINGLE_BUFFER_OK else (False,)
    out = None
    for single_buffer in attempts:
        try:
            out = _build_and_run(x_pad, params, activation, tm, n_tiles,
                                 vmem_cap, single_buffer, parallel)
            break
        except Exception:
            if not single_buffer:
                raise
            _SINGLE_BUFFER_OK = False  # this build rejects Buffered(1); fall back
    return out[:M, : params.dims[-1]]


def init_mlp_params(key, input_dim, hidden_dim_list):
    """Deterministic init mimicking nn.Linear default (U(-1/sqrt(fan_in), +))."""
    dims = [input_dim] + list(hidden_dim_list)
    params = []
    for d_in, d_out in zip(dims[:-1], dims[1:]):
        key, kw, kb = jax.random.split(key, 3)
        bound = 1.0 / math.sqrt(d_in)
        w = jax.random.uniform(kw, (d_in, d_out), jnp.float32, -bound, bound)
        b = jax.random.uniform(kb, (1, d_out), jnp.float32, -bound, bound)
        params.append((w, b))
    return params


def mlp_forward_ref(x, params, activation):
    """Pure-JAX reference for sanity checking."""
    for w, b in params:
        x = x @ w + b
        if activation == "relu":
            x = jnp.maximum(x, 0.0)
        elif activation == "silu":
            x = x * jax.nn.sigmoid(x)
        elif activation == "softplus":
            x = jax.nn.softplus(x) - SHIFT
    return x


if __name__ == "__main__":
    key = jax.random.PRNGKey(0)
    k_x, k_p = jax.random.split(key)

    batch = 16
    input_dim = 32
    hidden_dim_list = [64, 32]

    x = jax.random.normal(k_x, (batch, input_dim), dtype=jnp.float32)
    params = init_mlp_params(k_p, input_dim, hidden_dim_list)

    # f32 compute path: tight tolerance; bf16 compute path (MXU-native): loose.
    for compute_dtype, base_tol in ((jnp.float32, 1e-5), (jnp.bfloat16, 6e-2)):
        prepared = prepare_mlp_params(params, input_dim, compute_dtype=compute_dtype)
        for activation in ("softplus", "relu", "silu", None):
            out = jax.block_until_ready(mlp_forward(x, prepared, activation))
            ref = mlp_forward_ref(x, params, activation)
            assert out.shape == (batch, hidden_dim_list[-1])
            assert out.dtype == x.dtype
            tol = max(base_tol, 5e-3) if activation == "silu" else base_tol  # approx EUP recip
            assert jnp.allclose(out, ref, atol=tol, rtol=tol), (
                f"mismatch for activation={activation} compute_dtype={compute_dtype}")

    print("KERNEL_OK")
</pallas_src>

<mosaic_0001>
module attributes {stable_mosaic.version = 11 : i64} {
  func.func @_mlp_fused_kernel(%arg0: i32, %arg1: memref<16x128xf32, #tpu.memory_space<vmem>>, %arg2: memref<128x128xf32, #tpu.memory_space<vmem>>, %arg3: memref<1x128xf32, #tpu.memory_space<vmem>>, %arg4: memref<128x128xf32, #tpu.memory_space<vmem>>, %arg5: memref<1x128xf32, #tpu.memory_space<vmem>>, %arg6: memref<16x128xf32, #tpu.memory_space<vmem>>) attributes {dimension_semantics = [#tpu.dimension_semantics<arbitrary>], iteration_bounds = array<i64: 1>, scalar_prefetch = 0 : i64, scratch_operands = 0 : i64, tpu.core_type = #tpu.core_type<tc>, window_params = [{transform_indices = @transform_0, window_bounds = array<i64: 16, 128>}, {pipeline_mode = #tpu.pipeline_mode<synchronous>, transform_indices = @transform_1, window_bounds = array<i64: 128, 128>}, {pipeline_mode = #tpu.pipeline_mode<synchronous>, transform_indices = @transform_2, window_bounds = array<i64: 1, 128>}, {pipeline_mode = #tpu.pipeline_mode<synchronous>, transform_indices = @transform_3, window_bounds = array<i64: 128, 128>}, {pipeline_mode = #tpu.pipeline_mode<synchronous>, transform_indices = @transform_4, window_bounds = array<i64: 1, 128>}, {transform_indices = @transform_5, window_bounds = array<i64: 16, 128>}]} {
    %c0 = arith.constant 0 : index
    %c0_0 = arith.constant 0 : index
    %0 = vector.load %arg1[%c0, %c0_0] : memref<16x128xf32, #tpu.memory_space<vmem>>, vector<16x128xf32>
    %c0_1 = arith.constant 0 : index
    %c0_2 = arith.constant 0 : index
    %1 = vector.load %arg2[%c0_1, %c0_2] : memref<128x128xf32, #tpu.memory_space<vmem>>, vector<128x128xf32>
    %cst = arith.constant dense<0.000000e+00> : vector<16x128xf32>
    %2 = tpu.matmul %0, %1, %cst {dimension_numbers = #tpu.dot_dimension_numbers<[1], [0], [0], [1], [0, 0, 1, 1], [], []>} : vector<16x128xf32>, vector<128x128xf32>, vector<16x128xf32> -> vector<16x128xf32>
    %c0_3 = arith.constant 0 : index
    %c0_4 = arith.constant 0 : index
    %3 = vector.load %arg3[%c0_3, %c0_4] : memref<1x128xf32, #tpu.memory_space<vmem>>, vector<1x128xf32>
    %4 = vector.broadcast %3 : vector<1x128xf32> to vector<16x128xf32>
    %5 = arith.addf %2, %4 : vector<16x128xf32>
    %cst_5 = arith.constant 0.000000e+00 : f32
    %6 = vector.broadcast %cst_5 : f32 to vector<16x128xf32>
    %7 = arith.maximumf %5, %6 : vector<16x128xf32>
    %8 = math.absf %5 : vector<16x128xf32>
    %cst_6 = arith.constant 0.000000e+00 : f32
    %9 = vector.broadcast %cst_6 : f32 to vector<16x128xf32>
    %10 = arith.subf %9, %8 : vector<16x128xf32>
    %11 = math.exp %10 : vector<16x128xf32>
    %12 = math.log1p %11 : vector<16x128xf32>
    %13 = arith.addf %7, %12 : vector<16x128xf32>
    %cst_7 = arith.constant 0.693147182 : f32
    %14 = vector.broadcast %cst_7 : f32 to vector<16x128xf32>
    %15 = arith.subf %13, %14 : vector<16x128xf32>
    %c0_8 = arith.constant 0 : index
    %c0_9 = arith.constant 0 : index
    %16 = vector.load %arg4[%c0_8, %c0_9] : memref<128x128xf32, #tpu.memory_space<vmem>>, vector<128x128xf32>
    %cst_10 = arith.constant dense<0.000000e+00> : vector<16x128xf32>
    %17 = tpu.matmul %15, %16, %cst_10 {dimension_numbers = #tpu.dot_dimension_numbers<[1], [0], [0], [1], [0, 0, 1, 1], [], []>} : vector<16x128xf32>, vector<128x128xf32>, vector<16x128xf32> -> vector<16x128xf32>
    %c0_11 = arith.constant 0 : index
    %c0_12 = arith.constant 0 : index
    %18 = vector.load %arg5[%c0_11, %c0_12] : memref<1x128xf32, #tpu.memory_space<vmem>>, vector<1x128xf32>
    %19 = vector.broadcast %18 : vector<1x128xf32> to vector<16x128xf32>
    %20 = arith.addf %17, %19 : vector<16x128xf32>
    %cst_13 = arith.constant 0.000000e+00 : f32
    %21 = vector.broadcast %cst_13 : f32 to vector<16x128xf32>
    %22 = arith.maximumf %20, %21 : vector<16x128xf32>
    %23 = math.absf %20 : vector<16x128xf32>
    %cst_14 = arith.constant 0.000000e+00 : f32
    %24 = vector.broadcast %cst_14 : f32 to vector<16x128xf32>
    %25 = arith.subf %24, %23 : vector<16x128xf32>
    %26 = math.exp %25 : vector<16x128xf32>
    %27 = math.log1p %26 : vector<16x128xf32>
    %28 = arith.addf %22, %27 : vector<16x128xf32>
    %cst_15 = arith.constant 0.693147182 : f32
    %29 = vector.broadcast %cst_15 : f32 to vector<16x128xf32>
    %30 = arith.subf %28, %29 : vector<16x128xf32>
    %c0_16 = arith.constant 0 : index
    %c0_17 = arith.constant 0 : index
    %31 = vector.load %arg6[%c0_16, %c0_17] : memref<16x128xf32, #tpu.memory_space<vmem>>, vector<16x128xf32>
    tpu.vector_store %arg6[%c0_16, %c0_17], %30 {strides = array<i32>} : memref<16x128xf32, #tpu.memory_space<vmem>>, vector<16x128xf32>,
    return
  }
  func.func @transform_0(%arg0: i32) -> (i32, i32) {
    %c0_i32 = arith.constant 0 : i32
    %c0_i32_0 = arith.constant 0 : i32
    return %arg0, %c0_i32 : i32, i32
  }
  func.func @transform_1(%arg0: i32) -> (i32, i32) {
    %c0_i32 = arith.constant 0 : i32
    %c0_i32_0 = arith.constant 0 : i32
    %c0_i32_1 = arith.constant 0 : i32
    return %c0_i32, %c0_i32_0 : i32, i32
  }
  func.func @transform_2(%arg0: i32) -> (i32, i32) {
    %c0_i32 = arith.constant 0 : i32
    %c0_i32_0 = arith.constant 0 : i32
    %c0_i32_1 = arith.constant 0 : i32
    return %c0_i32, %c0_i32_0 : i32, i32
  }
  func.func @transform_3(%arg0: i32) -> (i32, i32) {
    %c0_i32 = arith.constant 0 : i32
    %c0_i32_0 = arith.constant 0 : i32
    %c0_i32_1 = arith.constant 0 : i32
    return %c0_i32, %c0_i32_0 : i32, i32
  }
  func.func @transform_4(%arg0: i32) -> (i32, i32) {
    %c0_i32 = arith.constant 0 : i32
    %c0_i32_0 = arith.constant 0 : i32
    %c0_i32_1 = arith.constant 0 : i32
    return %c0_i32, %c0_i32_0 : i32, i32
  }
  func.func @transform_5(%arg0: i32) -> (i32, i32) {
    %c0_i32 = arith.constant 0 : i32
    %c0_i32_0 = arith.constant 0 : i32
    return %arg0, %c0_i32 : i32, i32
  }
}

module attributes {stable_mosaic.version = 11 : i64} {
  func.func @_mlp_fused_kernel(%arg0: i32, %arg1: memref<16x128xf32, #tpu.memory_space<vmem>>, %arg2: memref<128x128xf32, #tpu.memory_space<vmem>>, %arg3: memref<1x128xf32, #tpu.memory_space<vmem>>, %arg4: memref<128x128xf32, #tpu.memory_space<vmem>>, %arg5: memref<1x128xf32, #tpu.memory_space<vmem>>, %arg6: memref<16x128xf32, #tpu.memory_space<vmem>>) attributes {dimension_semantics = [#tpu.dimension_semantics<arbitrary>], iteration_bounds = array<i64: 1>, scalar_prefetch = 0 : i64, scratch_operands = 0 : i64, tpu.core_type = #tpu.core_type<tc>, window_params = [{transform_indices = @transform_0, window_bounds = array<i64: 16, 128>}, {pipeline_mode = #tpu.pipeline_mode<synchronous>, transform_indices = @transform_1, window_bounds = array<i64: 128, 128>}, {pipeline_mode = #tpu.pipeline_mode<synchronous>, transform_indices = @transform_2, window_bounds = array<i64: 1, 128>}, {pipeline_mode = #tpu.pipeline_mode<synchronous>, transform_indices = @transform_3, window_bounds = array<i64: 128, 128>}, {pipeline_mode = #tpu.pipeline_mode<synchronous>, transform_indices = @transform_4, window_bounds = array<i64: 1, 128>}, {transform_indices = @transform_5, window_bounds = array<i64: 16, 128>}]} {
    %c0 = arith.constant 0 : index
    %c0_0 = arith.constant 0 : index
    %0 = vector.load %arg1[%c0, %c0_0] : memref<16x128xf32, #tpu.memory_space<vmem>>, vector<16x128xf32>
    %c0_1 = arith.constant 0 : index
    %c0_2 = arith.constant 0 : index
    %1 = vector.load %arg2[%c0_1, %c0_2] : memref<128x128xf32, #tpu.memory_space<vmem>>, vector<128x128xf32>
    %cst = arith.constant dense<0.000000e+00> : vector<16x128xf32>
    %2 = tpu.matmul %0, %1, %cst {dimension_numbers = #tpu.dot_dimension_numbers<[1], [0], [0], [1], [0, 0, 1, 1], [], []>} : vector<16x128xf32>, vector<128x128xf32>, vector<16x128xf32> -> vector<16x128xf32>
    %c0_3 = arith.constant 0 : index
    %c0_4 = arith.constant 0 : index
    %3 = vector.load %arg3[%c0_3, %c0_4] : memref<1x128xf32, #tpu.memory_space<vmem>>, vector<1x128xf32>
    %4 = vector.broadcast %3 : vector<1x128xf32> to vector<16x128xf32>
    %5 = arith.addf %2, %4 : vector<16x128xf32>
    %cst_5 = arith.constant 0.000000e+00 : f32
    %6 = vector.broadcast %cst_5 : f32 to vector<16x128xf32>
    %7 = arith.maximumf %5, %6 : vector<16x128xf32>
    %8 = math.absf %5 : vector<16x128xf32>
    %cst_6 = arith.constant 0.000000e+00 : f32
    %9 = vector.broadcast %cst_6 : f32 to vector<16x128xf32>
    %10 = arith.subf %9, %8 : vector<16x128xf32>
    %11 = math.exp %10 : vector<16x128xf32>
    %12 = math.log1p %11 : vector<16x128xf32>
    %13 = arith.addf %7, %12 : vector<16x128xf32>
    %cst_7 = arith.constant 0.693147182 : f32
    %14 = vector.broadcast %cst_7 : f32 to vector<16x128xf32>
    %15 = arith.subf %13, %14 : vector<16x128xf32>
    %c0_8 = arith.constant 0 : index
    %c0_9 = arith.constant 0 : index
    %16 = vector.load %arg4[%c0_8, %c0_9] : memref<128x128xf32, #tpu.memory_space<vmem>>, vector<128x128xf32>
    %cst_10 = arith.constant dense<0.000000e+00> : vector<16x128xf32>
    %17 = tpu.matmul %15, %16, %cst_10 {dimension_numbers = #tpu.dot_dimension_numbers<[1], [0], [0], [1], [0, 0, 1, 1], [], []>} : vector<16x128xf32>, vector<128x128xf32>, vector<16x128xf32> -> vector<16x128xf32>
    %c0_11 = arith.constant 0 : index
    %c0_12 = arith.constant 0 : index
    %18 = vector.load %arg5[%c0_11, %c0_12] : memref<1x128xf32, #tpu.memory_space<vmem>>, vector<1x128xf32>
    %19 = vector.broadcast %18 : vector<1x128xf32> to vector<16x128xf32>
    %20 = arith.addf %17, %19 : vector<16x128xf32>
    %cst_13 = arith.constant 0.000000e+00 : f32
    %21 = vector.broadcast %cst_13 : f32 to vector<16x128xf32>
    %22 = arith.maximumf %20, %21 : vector<16x128xf32>
    %23 = math.absf %20 : vector<16x128xf32>
    %cst_14 = arith.constant 0.000000e+00 : f32
    %24 = vector.broadcast %cst_14 : f32 to vector<16x128xf32>
    %25 = arith.subf %24, %23 : vector<16x128xf32>
    %26 = math.exp %25 : vector<16x128xf32>
    %27 = math.log1p %26 : vector<16x128xf32>
    %28 = arith.addf %22, %27 : vector<16x128xf32>
    %cst_15 = arith.constant 0.693147182 : f32
    %29 = vector.broadcast %cst_15 : f32 to vector<16x128xf32>
    %30 = arith.subf %28, %29 : vector<16x128xf32>
    %c0_16 = arith.constant 0 : index
    %c0_17 = arith.constant 0 : index
    %31 = vector.load %arg6[%c0_16, %c0_17] : memref<16x128xf32, #tpu.memory_space<vmem>>, vector<16x128xf32>
    tpu.vector_store %arg6[%c0_16, %c0_17], %30 {strides = array<i32>} : memref<16x128xf32, #tpu.memory_space<vmem>>, vector<16x128xf32>,
    return
  }
  func.func @transform_0(%arg0: i32) -> (i32, i32) {
    %c0_i32 = arith.constant 0 : i32
    %c0_i32_0 = arith.constant 0 : i32
    return %arg0, %c0_i32 : i32, i32
  }
  func.func @transform_1(%arg0: i32) -> (i32, i32) {
    %c0_i32 = arith.constant 0 : i32
    %c0_i32_0 = arith.constant 0 : i32
    %c0_i32_1 = arith.constant 0 : i32
    return %c0_i32, %c0_i32_0 : i32, i32
  }
  func.func @transform_2(%arg0: i32) -> (i32, i32) {
    %c0_i32 = arith.constant 0 : i32
    %c0_i32_0 = arith.constant 0 : i32
    %c0_i32_1 = arith.constant 0 : i32
    return %c0_i32, %c0_i32_0 : i32, i32
  }
  func.func @transform_3(%arg0: i32) -> (i32, i32) {
    %c0_i32 = arith.constant 0 : i32
    %c0_i32_0 = arith.constant 0 : i32
    %c0_i32_1 = arith.constant 0 : i32
    return %c0_i32, %c0_i32_0 : i32, i32
  }
  func.func @transform_4(%arg0: i32) -> (i32, i32) {
    %c0_i32 = arith.constant 0 : i32
    %c0_i32_0 = arith.constant 0 : i32
    %c0_i32_1 = arith.constant 0 : i32
    return %c0_i32, %c0_i32_0 : i32, i32
  }
  func.func @transform_5(%arg0: i32) -> (i32, i32) {
    %c0_i32 = arith.constant 0 : i32
    %c0_i32_0 = arith.constant 0 : i32
    return %arg0, %c0_i32 : i32, i32
  }
}

</mosaic_0001>

<llo_original>
// kernel: tpu_custom_call.1
$region0: #{tpu_custom_call.1}
  #allocation0 [shape = 'u32[]', space=smem, size = 0x4, offset = 0x4, fixed_abs, tag = 'smem constant byte address 0x4 - core index']
  #allocation1 [shape = 'u32[72,128]{1,0:T(1,128)}', space=vmem, size = 0x9000, scoped, tag = 'internal scratch']
  %s0 = inlined_call_operand.hbm [shape: f32[16,128], index: 0, kind: input, shape index: {}]
  %s1 = inlined_call_operand.hbm [shape: f32[128,128], index: 1, kind: input, shape index: {}]
  %s2 = inlined_call_operand.vmem [shape: f32[1,128], index: 2, kind: input, shape index: {}]
  %s3 = inlined_call_operand.hbm [shape: f32[128,128], index: 3, kind: input, shape index: {}]
  %s4 = inlined_call_operand.vmem [shape: f32[1,128], index: 4, kind: input, shape index: {}]
  %s5 = inlined_call_operand.hbm [shape: f32[16,128], index: 5, kind: output, shape index: {}]
  %s6 = sld [smem:[#allocation0]]
  $region42: #{tpu_custom_call.1} parent=0
    _
  %s8 = ssub.s32 1, %s6
  %s9 = scalar_select 0, %s8, %s6
  $region1: #{tpu_custom_call.1} parent=0
    #allocation2 [shape = 'u8[8192]{0}', space=vmem, size = 0x2000, scoped, tag = 'input window, operand 0, single buffered']
    #allocation3 [shape = 's32[1]{0}', space=sflag, size = 0x4, scoped, tag = 'scoped memory for tpu_custom_call.1']
    #allocation4 [shape = 's32[1]{0}', space=sflag, size = 0x4, scoped, tag = 'scoped memory for tpu_custom_call.1']
    #allocation5 [shape = 'u8[65536]{0}', space=vmem, size = 0x10000, scoped, tag = 'input window, operand 1, single buffered']
    #allocation6 [shape = 's32[1]{0}', space=sflag, size = 0x4, scoped, tag = 'scoped memory for tpu_custom_call.1']
    #allocation7 [shape = 'u8[65536]{0}', space=vmem, size = 0x10000, scoped, tag = 'input window, operand 3, single buffered']
    #allocation8 [shape = 'u8[8192]{0}', space=vmem, size = 0x2000, scoped, tag = 'output window, operand 0, single buffered']
    %10 = vsyncpa [#allocation3], 0
    %11 = vsyncpa [#allocation6], 0
    %12 = vsyncpa [#allocation4], 0
    // Predicated region
    $region2: #{tpu_custom_call.1} parent=1 // pred_check
      _
    $region3: #{tpu_custom_call.1} parent=1 // pred_check_branch
      %14 = sbr.rel (0) target = $region5
    $region4: #{tpu_custom_call.1} parent=1 // pred_region
      %16 = vsyncadd [#allocation3], 0
      %s17 = sshll.u32 %s0, 4
      %s18 = int_to_ptr.hbm [resolvable:$true] %s17
      %s19 = sshll.u32 [#allocation2], 4
      %s20 = int_to_ptr.vmem [resolvable:$true] %s19
      %25 = dma.hbm_to_vmem [thread:$0]  %s18, 256, %s20, [#allocation3], 128, 128, 8
    $region5: #{tpu_custom_call.1} parent=1 // pred_fallthru
      _
    // Predicated region
    $region6: #{tpu_custom_call.1} parent=1 // pred_check
      _
    $region7: #{tpu_custom_call.1} parent=1 // pred_check_branch
      %27 = sbr.rel (0) target = $region9
    $region8: #{tpu_custom_call.1} parent=1 // pred_region
      %29 = vsyncadd [#allocation6], 0
      %s30 = sshll.u32 %s1, 4
      %s31 = int_to_ptr.hbm [resolvable:$true] %s30
      %s32 = sshll.u32 [#allocation5], 4
      %s33 = int_to_ptr.vmem [resolvable:$true] %s32
      %38 = dma.hbm_to_vmem [thread:$0]  %s31, 2048, %s33, [#allocation6], 128, 128, 8
    $region9: #{tpu_custom_call.1} parent=1 // pred_fallthru
      _
    // Predicated region
    $region10: #{tpu_custom_call.1} parent=1 // pred_check
      _
    $region11: #{tpu_custom_call.1} parent=1 // pred_check_branch
      %40 = sbr.rel (0) target = $region13
    $region12: #{tpu_custom_call.1} parent=1 // pred_region
      _
    $region13: #{tpu_custom_call.1} parent=1 // pred_fallthru
      _
    // Predicated region
    $region14: #{tpu_custom_call.1} parent=1 // pred_check
      _
    $region15: #{tpu_custom_call.1} parent=1 // pred_check_branch
      %42 = sbr.rel (0) target = $region17
    $region16: #{tpu_custom_call.1} parent=1 // pred_region
      %44 = vsyncadd [#allocation6], 0
      %s45 = sshll.u32 %s3, 4
      %s46 = int_to_ptr.hbm [resolvable:$true] %s45
      %s47 = sshll.u32 [#allocation7], 4
      %s48 = int_to_ptr.vmem [resolvable:$true] %s47
      %53 = dma.hbm_to_vmem [thread:$0]  %s46, 2048, %s48, [#allocation6], 128, 128, 8
    $region17: #{tpu_custom_call.1} parent=1 // pred_fallthru
      _
    // Predicated region
    $region18: #{tpu_custom_call.1} parent=1 // pred_check
      _
    $region19: #{tpu_custom_call.1} parent=1 // pred_check_branch
      %55 = sbr.rel (0) target = $region21
    $region20: #{tpu_custom_call.1} parent=1 // pred_region
      _
    $region21: #{tpu_custom_call.1} parent=1 // pred_fallthru
      _
    // Predicated region
    $region22: #{tpu_custom_call.1} parent=1 // pred_check
      _
    $region23: #{tpu_custom_call.1} parent=1 // pred_check_branch
      %57 = sbr.rel (0) target = $region25
    $region24: #{tpu_custom_call.1} parent=1 // pred_region
      %59 = dma.done [#allocation3], 256
    $region25: #{tpu_custom_call.1} parent=1 // pred_fallthru
      _
    // Predicated region
    $region26: #{tpu_custom_call.1} parent=1 // pred_check
      _
    $region27: #{tpu_custom_call.1} parent=1 // pred_check_branch
      %61 = sbr.rel (0) target = $region29
    $region28: #{tpu_custom_call.1} parent=1 // pred_region
      %63 = dma.done [#allocation6], 2048
    $region29: #{tpu_custom_call.1} parent=1 // pred_fallthru
      _
    // Predicated region
    $region30: #{tpu_custom_call.1} parent=1 // pred_check
      _
    $region31: #{tpu_custom_call.1} parent=1 // pred_check_branch
      %65 = sbr.rel (0) target = $region33
    $region32: #{tpu_custom_call.1} parent=1 // pred_region
      %67 = dma.done [#allocation6], 2048
    $region33: #{tpu_custom_call.1} parent=1 // pred_fallthru
      _
    %v68 = vld [vmem:[#allocation2] sm:$0xff]
    %v69 = vld [vmem:[#allocation2 + $0x8] sm:$0xff]
    %v70 = vld [vmem:[#allocation5] sm:$0xff]
    %v71 = vld [vmem:[#allocation5 + $0x8] sm:$0xff]
    %v72 = vld [vmem:[#allocation5 + $0x10] sm:$0xff]
    %v73 = vld [vmem:[#allocation5 + $0x18] sm:$0xff]
    %v74 = vld [vmem:[#allocation5 + $0x20] sm:$0xff]
    %v75 = vld [vmem:[#allocation5 + $0x28] sm:$0xff]
    %v76 = vld [vmem:[#allocation5 + $0x30] sm:$0xff]
    %v77 = vld [vmem:[#allocation5 + $0x38] sm:$0xff]
    %v78 = vld [vmem:[#allocation5 + $0x40] sm:$0xff]
    %v79 = vld [vmem:[#allocation5 + $0x48] sm:$0xff]
    %v80 = vld [vmem:[#allocation5 + $0x50] sm:$0xff]
    %v81 = vld [vmem:[#allocation5 + $0x58] sm:$0xff]
    %v82 = vld [vmem:[#allocation5 + $0x60] sm:$0xff]
    %v83 = vld [vmem:[#allocation5 + $0x68] sm:$0xff]
    %v84 = vld [vmem:[#allocation5 + $0x70] sm:$0xff]
    %v85 = vld [vmem:[#allocation5 + $0x78] sm:$0xff]
    %v86 = vld [vmem:[%s2] sm:$0x1]
    %v88 = vperm.slane %v86, 0
    %90 = vmatpush.msra.mxu0 %v85
    %91 = vmatpush.msra.mxu0 %v84
    %92 = vmatpush.msra.mxu0 %v83
    %93 = vmatpush.msra.mxu0 %v82
    %94 = vmatpush.msra.mxu0 %v81
    %95 = vmatpush.msra.mxu0 %v80
    %96 = vmatpush.msra.mxu0 %v79
    %97 = vmatpush.msra.mxu0 %v78
    %98 = vmatpush.msra.mxu0 %v77
    %99 = vmatpush.msra.mxu0 %v76
    %100 = vmatpush.msra.mxu0 %v75
    %101 = vmatpush.msra.mxu0 %v74
    %102 = vmatpush.msra.mxu0 %v73
    %103 = vmatpush.msra.mxu0 %v72
    %104 = vmatpush.msra.mxu0 %v71
    %105 = vmatpush.msra.mxu0 %v70
    %106 = vmatmul.f32.gmra.mxu0 %v68
    %v107 = vpop.f32.mrf.mxu0
    %v108 = vadd.f32 %v88, %v107
    %109 = vmatmul.f32.gmra.mxu0 %v69
    %v110 = vpop.f32.mrf.mxu0
    %v111 = vadd.f32 %v88, %v110
    %112 = vdwg.mxu0
    %v113 = vmax.f32 %v108, 0.0
    %v114 = vmax.f32 %v111, 0.0
    %v115 = vand.u32 2147483647, %v108
    %v116 = vand.u32 2147483647, %v111
    %v117 = vsub.f32 0.0, %v115
    %v118 = vsub.f32 0.0, %v116
    %v119 = vmul.f32 %v117, 1.442695
    %v120 = vpow.pop %v119
    %v121 = vmul.f32 %v118, 1.442695
    %v122 = vpow.pop %v121
    %v123 = vadd.f32 %v120, 1.0
    %v124 = vlog2.pop %v123
    %v125 = vmul.f32 %v124, 0.6931472
    %v126 = vmul.f32 -0.5, %v120
    %v127 = vadd.f32 %v126, 1.0
    %v128 = vmul.f32 %v127, %v120
    %v129 = vand.u32 2147483647, %v120
    %vm130 = vcmp.lt.f32.partialorder %v129, 0.0004427343
    %v131 = vsel %vm130, %v128, %v125
    %v132 = vadd.f32 %v122, 1.0
    %v133 = vlog2.pop %v132
    %v134 = vmul.f32 %v133, 0.6931472
    %v135 = vmul.f32 -0.5, %v122
    %v136 = vadd.f32 %v135, 1.0
    %v137 = vmul.f32 %v136, %v122
    %v138 = vand.u32 2147483647, %v122
    %vm139 = vcmp.lt.f32.partialorder %v138, 0.0004427343
    %v140 = vsel %vm139, %v137, %v134
    %v141 = vadd.f32 %v113, %v131
    %v142 = vadd.f32 %v114, %v140
    %v143 = vsub.f32 %v141, 0.6931472
    %v144 = vsub.f32 %v142, 0.6931472
    %v145 = vld [vmem:[#allocation7] sm:$0xff]
    %v146 = vld [vmem:[#allocation7 + $0x8] sm:$0xff]
    %v147 = vld [vmem:[#allocation7 + $0x10] sm:$0xff]
    %v148 = vld [vmem:[#allocation7 + $0x18] sm:$0xff]
    %v149 = vld [vmem:[#allocation7 + $0x20] sm:$0xff]
    %v150 = vld [vmem:[#allocation7 + $0x28] sm:$0xff]
    %v151 = vld [vmem:[#allocation7 + $0x30] sm:$0xff]
    %v152 = vld [vmem:[#allocation7 + $0x38] sm:$0xff]
    %v153 = vld [vmem:[#allocation7 + $0x40] sm:$0xff]
    %v154 = vld [vmem:[#allocation7 + $0x48] sm:$0xff]
    %v155 = vld [vmem:[#allocation7 + $0x50] sm:$0xff]
    %v156 = vld [vmem:[#allocation7 + $0x58] sm:$0xff]
    %v157 = vld [vmem:[#allocation7 + $0x60] sm:$0xff]
    %v158 = vld [vmem:[#allocation7 + $0x68] sm:$0xff]
    %v159 = vld [vmem:[#allocation7 + $0x70] sm:$0xff]
    %v160 = vld [vmem:[#allocation7 + $0x78] sm:$0xff]
    %v161 = vld [vmem:[%s4] sm:$0x1]
    %v163 = vperm.slane %v161, 0
    %165 = vmatpush.msra.mxu0 %v160
    %166 = vmatpush.msra.mxu0 %v159
    %167 = vmatpush.msra.mxu0 %v158
    %168 = vmatpush.msra.mxu0 %v157
    %169 = vmatpush.msra.mxu0 %v156
    %170 = vmatpush.msra.mxu0 %v155
    %171 = vmatpush.msra.mxu0 %v154
    %172 = vmatpush.msra.mxu0 %v153
    %173 = vmatpush.msra.mxu0 %v152
    %174 = vmatpush.msra.mxu0 %v151
    %175 = vmatpush.msra.mxu0 %v150
    %176 = vmatpush.msra.mxu0 %v149
    %177 = vmatpush.msra.mxu0 %v148
    %178 = vmatpush.msra.mxu0 %v147
    %179 = vmatpush.msra.mxu0 %v146
    %180 = vmatpush.msra.mxu0 %v145
    %181 = vmatmul.f32.gmra.mxu0 %v143
    %v182 = vpop.f32.mrf.mxu0
    %v183 = vadd.f32 %v163, %v182
    %184 = vmatmul.f32.gmra.mxu0 %v144
    %v185 = vpop.f32.mrf.mxu0
    %v186 = vadd.f32 %v163, %v185
    %187 = vdwg.mxu0
    %v188 = vmax.f32 %v183, 0.0
    %v189 = vmax.f32 %v186, 0.0
    %v190 = vand.u32 2147483647, %v183
    %v191 = vand.u32 2147483647, %v186
    %v192 = vsub.f32 0.0, %v190
    %v193 = vsub.f32 0.0, %v191
    %v194 = vmul.f32 %v192, 1.442695
    %v195 = vpow.pop %v194
    %v196 = vmul.f32 %v193, 1.442695
    %v197 = vpow.pop %v196
    %v198 = vadd.f32 %v195, 1.0
    %v199 = vlog2.pop %v198
    %v200 = vmul.f32 %v199, 0.6931472
    %v201 = vmul.f32 -0.5, %v195
    %v202 = vadd.f32 %v201, 1.0
    %v203 = vmul.f32 %v202, %v195
    %v204 = vand.u32 2147483647, %v195
    %vm205 = vcmp.lt.f32.partialorder %v204, 0.0004427343
    %v206 = vsel %vm205, %v203, %v200
    %v207 = vadd.f32 %v197, 1.0
    %v208 = vlog2.pop %v207
    %v209 = vmul.f32 %v208, 0.6931472
    %v210 = vmul.f32 -0.5, %v197
    %v211 = vadd.f32 %v210, 1.0
    %v212 = vmul.f32 %v211, %v197
    %v213 = vand.u32 2147483647, %v197
    %vm214 = vcmp.lt.f32.partialorder %v213, 0.0004427343
    %v215 = vsel %vm214, %v212, %v209
    %v216 = vadd.f32 %v188, %v206
    %v217 = vadd.f32 %v189, %v215
    %v218 = vsub.f32 %v216, 0.6931472
    %v219 = vsub.f32 %v217, 0.6931472
    %220 = vst [vmem:[#allocation8] sm:$0xff] %v218
    %221 = vst [vmem:[#allocation8 + $0x8] sm:$0xff] %v219
    // Predicated region
    $region34: #{tpu_custom_call.1} parent=1 // pred_check
      _
    $region35: #{tpu_custom_call.1} parent=1 // pred_check_branch
      %223 = sbr.rel (0) target = $region37
    $region36: #{tpu_custom_call.1} parent=1 // pred_region
      %225 = vsyncadd [#allocation4], 0
      %s226 = sshll.u32 [#allocation8], 4
      %s227 = int_to_ptr.vmem [resolvable:$true] %s226
      %s228 = sshll.u32 %s5, 4
      %s229 = int_to_ptr.hbm [resolvable:$true] %s228
      %234 = dma.vmem_to_hbm [thread:$0]  %s227, 256, %s229, [#allocation4], 128, 128, 8
    $region37: #{tpu_custom_call.1} parent=1 // pred_fallthru
      _
    // Predicated region
    $region38: #{tpu_custom_call.1} parent=1 // pred_check
      _
    $region39: #{tpu_custom_call.1} parent=1 // pred_check_branch
      %236 = sbr.rel (0) target = $region41
    $region40: #{tpu_custom_call.1} parent=1 // pred_region
      %238 = dma.done [#allocation4], 256
    $region41: #{tpu_custom_call.1} parent=1 // pred_fallthru
      _
    %239 = vsyncpa [#allocation3], 1
    %240 = vsyncpa [#allocation6], 1
    %241 = vsyncpa [#allocation4], 1

// kernel: tpu_custom_call.1
$region0: #{tpu_custom_call.1}
  #allocation0 [shape = 'u32[]', space=smem, size = 0x4, offset = 0x4, fixed_abs, tag = 'smem constant byte address 0x4 - core index']
  #allocation1 [shape = 'u32[72,128]{1,0:T(1,128)}', space=vmem, size = 0x9000, scoped, tag = 'internal scratch']
  %s0 = inlined_call_operand.hbm [shape: f32[16,128], index: 0, kind: input, shape index: {}]
  %s1 = inlined_call_operand.hbm [shape: f32[128,128], index: 1, kind: input, shape index: {}]
  %s2 = inlined_call_operand.vmem [shape: f32[1,128], index: 2, kind: input, shape index: {}]
  %s3 = inlined_call_operand.hbm [shape: f32[128,128], index: 3, kind: input, shape index: {}]
  %s4 = inlined_call_operand.vmem [shape: f32[1,128], index: 4, kind: input, shape index: {}]
  %s5 = inlined_call_operand.hbm [shape: f32[16,128], index: 5, kind: output, shape index: {}]
  %s6 = sld [smem:[#allocation0]]
  $region42: #{tpu_custom_call.1} parent=0
    _
  %s8 = ssub.s32 1, %s6
  %s9 = scalar_select 0, %s8, %s6
  $region1: #{tpu_custom_call.1} parent=0
    #allocation2 [shape = 'u8[8192]{0}', space=vmem, size = 0x2000, scoped, tag = 'input window, operand 0, single buffered']
    #allocation3 [shape = 's32[1]{0}', space=sflag, size = 0x4, scoped, tag = 'scoped memory for tpu_custom_call.1']
    #allocation4 [shape = 's32[1]{0}', space=sflag, size = 0x4, scoped, tag = 'scoped memory for tpu_custom_call.1']
    #allocation5 [shape = 'u8[65536]{0}', space=vmem, size = 0x10000, scoped, tag = 'input window, operand 1, single buffered']
    #allocation6 [shape = 's32[1]{0}', space=sflag, size = 0x4, scoped, tag = 'scoped memory for tpu_custom_call.1']
    #allocation7 [shape = 'u8[65536]{0}', space=vmem, size = 0x10000, scoped, tag = 'input window, operand 3, single buffered']
    #allocation8 [shape = 'u8[8192]{0}', space=vmem, size = 0x2000, scoped, tag = 'output window, operand 0, single buffered']
    %10 = vsyncpa [#allocation3], 0
    %11 = vsyncpa [#allocation6], 0
    %12 = vsyncpa [#allocation4], 0
    // Predicated region
    $region2: #{tpu_custom_call.1} parent=1 // pred_check
      _
    $region3: #{tpu_custom_call.1} parent=1 // pred_check_branch
      %14 = sbr.rel (0) target = $region5
    $region4: #{tpu_custom_call.1} parent=1 // pred_region
      %16 = vsyncadd [#allocation3], 0
      %s17 = sshll.u32 %s0, 4
      %s18 = int_to_ptr.hbm [resolvable:$true] %s17
      %s19 = sshll.u32 [#allocation2], 4
      %s20 = int_to_ptr.vmem [resolvable:$true] %s19
      %25 = dma.hbm_to_vmem [thread:$0]  %s18, 256, %s20, [#allocation3], 128, 128, 8
    $region5: #{tpu_custom_call.1} parent=1 // pred_fallthru
      _
    // Predicated region
    $region6: #{tpu_custom_call.1} parent=1 // pred_check
      _
    $region7: #{tpu_custom_call.1} parent=1 // pred_check_branch
      %27 = sbr.rel (0) target = $region9
    $region8: #{tpu_custom_call.1} parent=1 // pred_region
      %29 = vsyncadd [#allocation6], 0
      %s30 = sshll.u32 %s1, 4
      %s31 = int_to_ptr.hbm [resolvable:$true] %s30
      %s32 = sshll.u32 [#allocation5], 4
      %s33 = int_to_ptr.vmem [resolvable:$true] %s32
      %38 = dma.hbm_to_vmem [thread:$0]  %s31, 2048, %s33, [#allocation6], 128, 128, 8
    $region9: #{tpu_custom_call.1} parent=1 // pred_fallthru
      _
    // Predicated region
    $region10: #{tpu_custom_call.1} parent=1 // pred_check
      _
    $region11: #{tpu_custom_call.1} parent=1 // pred_check_branch
      %40 = sbr.rel (0) target = $region13
    $region12: #{tpu_custom_call.1} parent=1 // pred_region
      _
    $region13: #{tpu_custom_call.1} parent=1 // pred_fallthru
      _
    // Predicated region
    $region14: #{tpu_custom_call.1} parent=1 // pred_check
      _
    $region15: #{tpu_custom_call.1} parent=1 // pred_check_branch
      %42 = sbr.rel (0) target = $region17
    $region16: #{tpu_custom_call.1} parent=1 // pred_region
      %44 = vsyncadd [#allocation6], 0
      %s45 = sshll.u32 %s3, 4
      %s46 = int_to_ptr.hbm [resolvable:$true] %s45
      %s47 = sshll.u32 [#allocation7], 4
      %s48 = int_to_ptr.vmem [resolvable:$true] %s47
      %53 = dma.hbm_to_vmem [thread:$0]  %s46, 2048, %s48, [#allocation6], 128, 128, 8
    $region17: #{tpu_custom_call.1} parent=1 // pred_fallthru
      _
    // Predicated region
    $region18: #{tpu_custom_call.1} parent=1 // pred_check
      _
    $region19: #{tpu_custom_call.1} parent=1 // pred_check_branch
      %55 = sbr.rel (0) target = $region21
    $region20: #{tpu_custom_call.1} parent=1 // pred_region
      _
    $region21: #{tpu_custom_call.1} parent=1 // pred_fallthru
      _
    // Predicated region
    $region22: #{tpu_custom_call.1} parent=1 // pred_check
      _
    $region23: #{tpu_custom_call.1} parent=1 // pred_check_branch
      %57 = sbr.rel (0) target = $region25
    $region24: #{tpu_custom_call.1} parent=1 // pred_region
      %59 = dma.done [#allocation3], 256
    $region25: #{tpu_custom_call.1} parent=1 // pred_fallthru
      _
    // Predicated region
    $region26: #{tpu_custom_call.1} parent=1 // pred_check
      _
    $region27: #{tpu_custom_call.1} parent=1 // pred_check_branch
      %61 = sbr.rel (0) target = $region29
    $region28: #{tpu_custom_call.1} parent=1 // pred_region
      %63 = dma.done [#allocation6], 2048
    $region29: #{tpu_custom_call.1} parent=1 // pred_fallthru
      _
    // Predicated region
    $region30: #{tpu_custom_call.1} parent=1 // pred_check
      _
    $region31: #{tpu_custom_call.1} parent=1 // pred_check_branch
      %65 = sbr.rel (0) target = $region33
    $region32: #{tpu_custom_call.1} parent=1 // pred_region
      %67 = dma.done [#allocation6], 2048
    $region33: #{tpu_custom_call.1} parent=1 // pred_fallthru
      _
    %v68 = vld [vmem:[#allocation2] sm:$0xff]
    %v69 = vld [vmem:[#allocation2 + $0x8] sm:$0xff]
    %v70 = vld [vmem:[#allocation5] sm:$0xff]
    %v71 = vld [vmem:[#allocation5 + $0x8] sm:$0xff]
    %v72 = vld [vmem:[#allocation5 + $0x10] sm:$0xff]
    %v73 = vld [vmem:[#allocation5 + $0x18] sm:$0xff]
    %v74 = vld [vmem:[#allocation5 + $0x20] sm:$0xff]
    %v75 = vld [vmem:[#allocation5 + $0x28] sm:$0xff]
    %v76 = vld [vmem:[#allocation5 + $0x30] sm:$0xff]
    %v77 = vld [vmem:[#allocation5 + $0x38] sm:$0xff]
    %v78 = vld [vmem:[#allocation5 + $0x40] sm:$0xff]
    %v79 = vld [vmem:[#allocation5 + $0x48] sm:$0xff]
    %v80 = vld [vmem:[#allocation5 + $0x50] sm:$0xff]
    %v81 = vld [vmem:[#allocation5 + $0x58] sm:$0xff]
    %v82 = vld [vmem:[#allocation5 + $0x60] sm:$0xff]
    %v83 = vld [vmem:[#allocation5 + $0x68] sm:$0xff]
    %v84 = vld [vmem:[#allocation5 + $0x70] sm:$0xff]
    %v85 = vld [vmem:[#allocation5 + $0x78] sm:$0xff]
    %v86 = vld [vmem:[%s2] sm:$0x1]
    %v88 = vperm.slane %v86, 0
    %90 = vmatpush.msra.mxu0 %v85
    %91 = vmatpush.msra.mxu0 %v84
    %92 = vmatpush.msra.mxu0 %v83
    %93 = vmatpush.msra.mxu0 %v82
    %94 = vmatpush.msra.mxu0 %v81
    %95 = vmatpush.msra.mxu0 %v80
    %96 = vmatpush.msra.mxu0 %v79
    %97 = vmatpush.msra.mxu0 %v78
    %98 = vmatpush.msra.mxu0 %v77
    %99 = vmatpush.msra.mxu0 %v76
    %100 = vmatpush.msra.mxu0 %v75
    %101 = vmatpush.msra.mxu0 %v74
    %102 = vmatpush.msra.mxu0 %v73
    %103 = vmatpush.msra.mxu0 %v72
    %104 = vmatpush.msra.mxu0 %v71
    %105 = vmatpush.msra.mxu0 %v70
    %106 = vmatmul.f32.gmra.mxu0 %v68
    %v107 = vpop.f32.mrf.mxu0
    %v108 = vadd.f32 %v88, %v107
    %109 = vmatmul.f32.gmra.mxu0 %v69
    %v110 = vpop.f32.mrf.mxu0
    %v111 = vadd.f32 %v88, %v110
    %112 = vdwg.mxu0
    %v113 = vmax.f32 %v108, 0.0
    %v114 = vmax.f32 %v111, 0.0
    %v115 = vand.u32 2147483647, %v108
    %v116 = vand.u32 2147483647, %v111
    %v117 = vsub.f32 0.0, %v115
    %v118 = vsub.f32 0.0, %v116
    %v119 = vmul.f32 %v117, 1.442695
    %v120 = vpow.pop %v119
    %v121 = vmul.f32 %v118, 1.442695
    %v122 = vpow.pop %v121
    %v123 = vadd.f32 %v120, 1.0
    %v124 = vlog2.pop %v123
    %v125 = vmul.f32 %v124, 0.6931472
    %v126 = vmul.f32 -0.5, %v120
    %v127 = vadd.f32 %v126, 1.0
    %v128 = vmul.f32 %v127, %v120
    %v129 = vand.u32 2147483647, %v120
    %vm130 = vcmp.lt.f32.partialorder %v129, 0.0004427343
    %v131 = vsel %vm130, %v128, %v125
    %v132 = vadd.f32 %v122, 1.0
    %v133 = vlog2.pop %v132
    %v134 = vmul.f32 %v133, 0.6931472
    %v135 = vmul.f32 -0.5, %v122
    %v136 = vadd.f32 %v135, 1.0
    %v137 = vmul.f32 %v136, %v122
    %v138 = vand.u32 2147483647, %v122
    %vm139 = vcmp.lt.f32.partialorder %v138, 0.0004427343
    %v140 = vsel %vm139, %v137, %v134
    %v141 = vadd.f32 %v113, %v131
    %v142 = vadd.f32 %v114, %v140
    %v143 = vsub.f32 %v141, 0.6931472
    %v144 = vsub.f32 %v142, 0.6931472
    %v145 = vld [vmem:[#allocation7] sm:$0xff]
    %v146 = vld [vmem:[#allocation7 + $0x8] sm:$0xff]
    %v147 = vld [vmem:[#allocation7 + $0x10] sm:$0xff]
    %v148 = vld [vmem:[#allocation7 + $0x18] sm:$0xff]
    %v149 = vld [vmem:[#allocation7 + $0x20] sm:$0xff]
    %v150 = vld [vmem:[#allocation7 + $0x28] sm:$0xff]
    %v151 = vld [vmem:[#allocation7 + $0x30] sm:$0xff]
    %v152 = vld [vmem:[#allocation7 + $0x38] sm:$0xff]
    %v153 = vld [vmem:[#allocation7 + $0x40] sm:$0xff]
    %v154 = vld [vmem:[#allocation7 + $0x48] sm:$0xff]
    %v155 = vld [vmem:[#allocation7 + $0x50] sm:$0xff]
    %v156 = vld [vmem:[#allocation7 + $0x58] sm:$0xff]
    %v157 = vld [vmem:[#allocation7 + $0x60] sm:$0xff]
    %v158 = vld [vmem:[#allocation7 + $0x68] sm:$0xff]
    %v159 = vld [vmem:[#allocation7 + $0x70] sm:$0xff]
    %v160 = vld [vmem:[#allocation7 + $0x78] sm:$0xff]
    %v161 = vld [vmem:[%s4] sm:$0x1]
    %v163 = vperm.slane %v161, 0
    %165 = vmatpush.msra.mxu0 %v160
    %166 = vmatpush.msra.mxu0 %v159
    %167 = vmatpush.msra.mxu0 %v158
    %168 = vmatpush.msra.mxu0 %v157
    %169 = vmatpush.msra.mxu0 %v156
    %170 = vmatpush.msra.mxu0 %v155
    %171 = vmatpush.msra.mxu0 %v154
    %172 = vmatpush.msra.mxu0 %v153
    %173 = vmatpush.msra.mxu0 %v152
    %174 = vmatpush.msra.mxu0 %v151
    %175 = vmatpush.msra.mxu0 %v150
    %176 = vmatpush.msra.mxu0 %v149
    %177 = vmatpush.msra.mxu0 %v148
    %178 = vmatpush.msra.mxu0 %v147
    %179 = vmatpush.msra.mxu0 %v146
    %180 = vmatpush.msra.mxu0 %v145
    %181 = vmatmul.f32.gmra.mxu0 %v143
    %v182 = vpop.f32.mrf.mxu0
    %v183 = vadd.f32 %v163, %v182
    %184 = vmatmul.f32.gmra.mxu0 %v144
    %v185 = vpop.f32.mrf.mxu0
    %v186 = vadd.f32 %v163, %v185
    %187 = vdwg.mxu0
    %v188 = vmax.f32 %v183, 0.0
    %v189 = vmax.f32 %v186, 0.0
    %v190 = vand.u32 2147483647, %v183
    %v191 = vand.u32 2147483647, %v186
    %v192 = vsub.f32 0.0, %v190
    %v193 = vsub.f32 0.0, %v191
    %v194 = vmul.f32 %v192, 1.442695
    %v195 = vpow.pop %v194
    %v196 = vmul.f32 %v193, 1.442695
    %v197 = vpow.pop %v196
    %v198 = vadd.f32 %v195, 1.0
    %v199 = vlog2.pop %v198
    %v200 = vmul.f32 %v199, 0.6931472
    %v201 = vmul.f32 -0.5, %v195
    %v202 = vadd.f32 %v201, 1.0
    %v203 = vmul.f32 %v202, %v195
    %v204 = vand.u32 2147483647, %v195
    %vm205 = vcmp.lt.f32.partialorder %v204, 0.0004427343
    %v206 = vsel %vm205, %v203, %v200
    %v207 = vadd.f32 %v197, 1.0
    %v208 = vlog2.pop %v207
    %v209 = vmul.f32 %v208, 0.6931472
    %v210 = vmul.f32 -0.5, %v197
    %v211 = vadd.f32 %v210, 1.0
    %v212 = vmul.f32 %v211, %v197
    %v213 = vand.u32 2147483647, %v197
    %vm214 = vcmp.lt.f32.partialorder %v213, 0.0004427343
    %v215 = vsel %vm214, %v212, %v209
    %v216 = vadd.f32 %v188, %v206
    %v217 = vadd.f32 %v189, %v215
    %v218 = vsub.f32 %v216, 0.6931472
    %v219 = vsub.f32 %v217, 0.6931472
    %220 = vst [vmem:[#allocation8] sm:$0xff] %v218
    %221 = vst [vmem:[#allocation8 + $0x8] sm:$0xff] %v219
    // Predicated region
    $region34: #{tpu_custom_call.1} parent=1 // pred_check
      _
    $region35: #{tpu_custom_call.1} parent=1 // pred_check_branch
      %223 = sbr.rel (0) target = $region37
    $region36: #{tpu_custom_call.1} parent=1 // pred_region
      %225 = vsyncadd [#allocation4], 0
      %s226 = sshll.u32 [#allocation8], 4
      %s227 = int_to_ptr.vmem [resolvable:$true] %s226
      %s228 = sshll.u32 %s5, 4
      %s229 = int_to_ptr.hbm [resolvable:$true] %s228
      %234 = dma.vmem_to_hbm [thread:$0]  %s227, 256, %s229, [#allocation4], 128, 128, 8
    $region37: #{tpu_custom_call.1} parent=1 // pred_fallthru
      _
    // Predicated region
    $region38: #{tpu_custom_call.1} parent=1 // pred_check
      _
    $region39: #{tpu_custom_call.1} parent=1 // pred_check_branch
      %236 = sbr.rel (0) target = $region41
    $region40: #{tpu_custom_call.1} parent=1 // pred_region
      %238 = dma.done [#allocation4], 256
    $region41: #{tpu_custom_call.1} parent=1 // pred_fallthru
      _
    %239 = vsyncpa [#allocation3], 1
    %240 = vsyncpa [#allocation6], 1
    %241 = vsyncpa [#allocation4], 1

</llo_original>
